<compile_context>
chip_gen: v6e
topology: v6e:2x2x1
jax: 0.10.0
libtpu: 0.0.40
codegen_flags: <defaults>
</compile_context>

<pallas_src>
import dataclasses
import functools

import numpy as np
import jax
import jax.numpy as jnp
from jax.experimental import pallas as pl
from jax.experimental.pallas import tpu as pltpu


# ----------------------------------------------------------------------------
# small helpers
# ----------------------------------------------------------------------------
def _ru(x, m):
    return (x + m - 1) // m * m


def _tile(d):
    """Pick a lane/contraction tile: 256 / 128 if divisible, else full dim."""
    if d % 256 == 0:
        return 256
    if d % 128 == 0:
        return 128
    return d


def _row_tile(m):
    """Row (sublane) tile and padded row count for elementwise kernels."""
    if m >= 256:
        return 256, _ru(m, 256)
    t = _ru(m, 16)
    return t, t


_VMEM_LIMIT = 64 * 1024 * 1024


class _KeyGen:
    """Deterministic key stream."""

    def __init__(self, key):
        self.key = key
        self.i = 0

    def __call__(self):
        self.i += 1
        return jax.random.fold_in(self.key, self.i)


# ----------------------------------------------------------------------------
# tiled matmul with fused epilogue (bias / SiLU / GeGLU gate / residual)
# and an optional second (a2, w2) contraction (used for the decoder skip
# conv so the channel-concat never has to be materialised in HBM).
# ----------------------------------------------------------------------------
def pallas_matmul(a, w, bias=None, act="none", residual=None, gate=None,
                  a2=None, w2=None, out_dtype=jnp.bfloat16):
    """y = epilogue(a @ w [+ a2 @ w2]); a:(M,K), w:(K,N), a2:(M,K2), w2:(K2,N).

    epilogue: r = acc + bias
              if gate is not None: r = gate * gelu(r)          (GeGLU)
              elif act == 'silu' : r = silu(r)
              if residual is not None: r = r + residual
    bf16 operands, f32 accumulation in VMEM scratch.
    """
    M, K = a.shape
    K2w, N = w.shape
    assert K == K2w
    a = a.astype(jnp.bfloat16)
    w = w.astype(jnp.bfloat16)

    if M >= 512:
        tm = 512
    elif M >= 256:
        tm = 256
    else:
        tm = _ru(M, 16)
    Mp = _ru(M, tm)
    tk = _tile(K)
    tn = _tile(N)
    k_steps = K // tk
    grid = (Mp // tm, N // tn, k_steps)

    def pad_rows(x):
        return jnp.pad(x, ((0, Mp - M), (0, 0))) if Mp != M else x

    a = pad_rows(a)
    bias2 = (jnp.zeros((1, N), jnp.float32) if bias is None
             else bias.astype(jnp.float32).reshape(1, N))

    has_a2 = a2 is not None
    has_gate = gate is not None
    has_res = residual is not None

    inputs = [a, w, bias2]
    in_specs = [
        pl.BlockSpec((tm, tk), lambda i, j, k: (i, k)),
        pl.BlockSpec((tk, tn), lambda i, j, k: (k, j)),
        pl.BlockSpec((1, tn), lambda i, j, k: (0, j)),
    ]
    if has_a2:
        K2 = a2.shape[1]
        inputs.append(pad_rows(a2.astype(jnp.bfloat16)))
        inputs.append(w2.astype(jnp.bfloat16))
        in_specs.append(pl.BlockSpec((tm, K2), lambda i, j, k: (i, 0)))
        in_specs.append(pl.BlockSpec((K2, tn), lambda i, j, k: (0, j)))
    if has_gate:
        inputs.append(pad_rows(gate.astype(jnp.bfloat16)))
        in_specs.append(pl.BlockSpec((tm, tn), lambda i, j, k: (i, j)))
    if has_res:
        inputs.append(pad_rows(residual.astype(jnp.bfloat16)))
        in_specs.append(pl.BlockSpec((tm, tn), lambda i, j, k: (i, j)))

    def kernel(*refs):
        a_ref, w_ref, bias_ref = refs[:3]
        idx = 3
        a2_ref = w2_ref = g_ref = r_ref = None
        if has_a2:
            a2_ref, w2_ref = refs[idx], refs[idx + 1]
            idx += 2
        if has_gate:
            g_ref = refs[idx]
            idx += 1
        if has_res:
            r_ref = refs[idx]
            idx += 1
        o_ref = refs[idx]
        acc_ref = refs[idx + 1]

        @pl.when(pl.program_id(2) == 0)
        def _():
            if has_a2:
                acc_ref[...] = jnp.dot(a2_ref[...], w2_ref[...],
                                       preferred_element_type=jnp.float32)
            else:
                acc_ref[...] = jnp.zeros_like(acc_ref)

        acc_ref[...] += jnp.dot(a_ref[...], w_ref[...],
                                preferred_element_type=jnp.float32)

        @pl.when(pl.program_id(2) == k_steps - 1)
        def _():
            r = acc_ref[...] + bias_ref[...]
            if has_gate:
                gl = 0.5 * r * (1.0 + jax.lax.erf(r * 0.7071067811865476))
                r = g_ref[...].astype(jnp.float32) * gl
            elif act == "silu":
                r = r * jax.nn.sigmoid(r)
            if has_res:
                r = r + r_ref[...].astype(jnp.float32)
            o_ref[...] = r.astype(o_ref.dtype)

    out = pl.pallas_call(
        kernel,
        out_shape=jax.ShapeDtypeStruct((Mp, N), out_dtype),
        grid_spec=pltpu.PrefetchScalarGridSpec(
            num_scalar_prefetch=0,
            grid=grid,
            in_specs=in_specs,
            out_specs=pl.BlockSpec((tm, tn), lambda i, j, k: (i, j)),
            scratch_shapes=[pltpu.VMEM((tm, tn), jnp.float32)],
        ),
        compiler_params=pltpu.CompilerParams(
            dimension_semantics=("parallel", "parallel", "arbitrary"),
            vmem_limit_bytes=_VMEM_LIMIT),
    )(*inputs)
    if Mp != M:
        out = out[:M]
    return out


# ----------------------------------------------------------------------------
# capability probe: can the DMA engine copy HBM windows starting at an
# arbitrary (non-8-aligned) second-to-last-dim offset?
# ----------------------------------------------------------------------------
_UNALIGNED_DMA = None


def _probe_unaligned_dma():
    def kernel(x_hbm, o_ref, buf, sem):
        b = pl.program_id(0)
        cp = pltpu.make_async_copy(x_hbm.at[b, pl.ds(3, 16), :], buf, sem.at[0])
        cp.start()
        cp.wait()
        o_ref[0] = buf[...]

    x = (jnp.arange(2 * 40 * 128, dtype=jnp.float32) % 251.0)
    x = x.astype(jnp.bfloat16).reshape(2, 40, 128)
    out = pl.pallas_call(
        kernel,
        out_shape=jax.ShapeDtypeStruct((2, 16, 128), jnp.bfloat16),
        grid=(2,),
        in_specs=[pl.BlockSpec(memory_space=pl.ANY)],
        out_specs=pl.BlockSpec((1, 16, 128), lambda b: (b, 0, 0)),
        scratch_shapes=[pltpu.VMEM((16, 128), jnp.bfloat16),
                        pltpu.SemaphoreType.DMA((1,))],
        compiler_params=pltpu.CompilerParams(
            dimension_semantics=("arbitrary",)),
    )(x)
    out = jax.block_until_ready(out)
    return bool(jnp.array_equal(out, x[:, 3:19, :]))


def unaligned_dma_ok():
    global _UNALIGNED_DMA
    if _UNALIGNED_DMA is None:
        try:
            _UNALIGNED_DMA = _probe_unaligned_dma()
        except Exception:
            _UNALIGNED_DMA = False
    return _UNALIGNED_DMA


# ----------------------------------------------------------------------------
# fused 3x3 stride-1 convolution
#   * taps DMA'd from HBM at their element offsets (no im2col in HBM, no
#     misaligned in-kernel slicing), accumulated into f32 VMEM scratch.
#   * per-batch time-embedding add, bias, SiLU and residual fused in epilogue.
#   * output stored lane-dense as (B, H*W, Cout) directly.
# ----------------------------------------------------------------------------
def _conv3x3_impl(p, x, emb, act, residual, manual):
    B, H, W, Cin = x.shape
    Cout = p["w"].shape[-1]
    rows_out = H * W
    core_rows = (H + 2) * W
    R = _ru(core_rows + 2, 8)

    # Row-padded (top/bottom), no column padding: boundary taps are masked
    # in-kernel. One leading dummy row keeps all tap offsets >= 0.
    xp = jnp.pad(x.astype(jnp.bfloat16), ((0, 0), (1, 1), (0, 0), (0, 0)))
    x_flat = jnp.pad(xp.reshape(B, core_rows, Cin),
                     ((0, 0), (1, R - core_rows - 1), (0, 0)))

    taps = [kh * W + kw for kh in range(3) for kw in range(3)]
    tn = _tile(Cout)
    n_tiles = Cout // tn
    has_emb = emb is not None
    has_res = residual is not None

    inputs = [x_flat, p["w"].astype(jnp.bfloat16),
              p["b"].astype(jnp.float32).reshape(1, Cout)]
    if manual:
        x_spec = pl.BlockSpec(memory_space=pl.ANY)
    else:
        x_spec = pl.BlockSpec((1, R, Cin), lambda b, n: (b, 0, 0))
    in_specs = [x_spec,
                pl.BlockSpec((9, Cin, tn), lambda b, n: (0, 0, n)),
                pl.BlockSpec((1, tn), lambda b, n: (0, n))]
    if has_emb:
        inputs.append(emb.astype(jnp.float32).reshape(B, 1, Cout))
        in_specs.append(pl.BlockSpec((1, 1, tn), lambda b, n: (b, 0, n)))
    if has_res:
        inputs.append(residual.astype(jnp.bfloat16).reshape(B, rows_out, Cout))
        in_specs.append(pl.BlockSpec((1, rows_out, tn), lambda b, n: (b, 0, n)))

    def kernel(*refs):
        x_ref, w_ref, b_ref = refs[:3]
        idx = 3
        e_ref = r_ref = None
        if has_emb:
            e_ref = refs[idx]
            idx += 1
        if has_res:
            r_ref = refs[idx]
            idx += 1
        o_ref = refs[idx]
        xbuf, sem, acc_ref = refs[idx + 1], refs[idx + 2], refs[idx + 3]

        b = pl.program_id(0)
        col = jax.lax.broadcasted_iota(jnp.int32, (rows_out, 1), 0) % W
        not_left = col != 0
        not_right = col != (W - 1)

        if manual:
            def dma(t, slot):
                return pltpu.make_async_copy(
                    x_ref.at[b, pl.ds(taps[t], rows_out), :],
                    xbuf.at[slot], sem.at[slot])
            dma(0, 0).start()

        for t in range(9):
            if manual:
                slot = t & 1
                if t + 1 < 9:
                    dma(t + 1, 1 - slot).start()
                dma(t, slot).wait()
                win = xbuf[slot]
            else:
                off = taps[t]
                win = x_ref[0, off:off + rows_out, :]
            kw = t % 3
            if kw == 0:
                win = jnp.where(not_left, win, 0)
            elif kw == 2:
                win = jnp.where(not_right, win, 0)
            d = jnp.dot(win, w_ref[t], preferred_element_type=jnp.float32)
            if t == 0:
                acc_ref[...] = d
            else:
                acc_ref[...] += d

        r = acc_ref[...] + b_ref[...]
        if act == "silu":
            r = r * jax.nn.sigmoid(r)
        if has_emb:
            r = r + e_ref[0]
        if has_res:
            r = r + r_ref[0].astype(jnp.float32)
        o_ref[0] = r.astype(o_ref.dtype)

    # TODO(synk): at real SR resolutions add halo-tiled row blocks so a single
    # batch's spatial extent does not have to live in VMEM at once.
    out = pl.pallas_call(
        kernel,
        out_shape=jax.ShapeDtypeStruct((B, rows_out, Cout), jnp.bfloat16),
        grid=(B, n_tiles),
        in_specs=in_specs,
        out_specs=pl.BlockSpec((1, rows_out, tn), lambda b, n: (b, 0, n)),
        scratch_shapes=[pltpu.VMEM((2, rows_out, Cin), jnp.bfloat16),
                        pltpu.SemaphoreType.DMA((2,)),
                        pltpu.VMEM((rows_out, tn), jnp.float32)],
        compiler_params=pltpu.CompilerParams(
            dimension_semantics=("parallel", "arbitrary"),
            vmem_limit_bytes=_VMEM_LIMIT),
    )(*inputs)
    return out.reshape(B, H, W, Cout)


def conv3x3(p, x, emb=None, act="none", residual=None):
    """3x3, stride 1, pad 1, NHWC; weight stored as (9, Cin, Cout) bf16."""
    global _UNALIGNED_DMA
    if unaligned_dma_ok():
        try:
            return _conv3x3_impl(p, x, emb, act, residual, manual=True)
        except Exception:
            _UNALIGNED_DMA = False   # fall back to in-kernel slicing
    return _conv3x3_impl(p, x, emb, act, residual, manual=False)


def conv_down(p, x):
    """3x3, stride 2, pad 1 downsampling conv via im2col + tiled matmul."""
    # TODO(synk): fold the 9 taps into the matmul K grid axis (strided DMA /
    # space-to-depth) to avoid the im2col materialisation for the 3 downsample
    # convs.
    B, H, W, Cin = x.shape
    xp = jnp.pad(x.astype(jnp.bfloat16), ((0, 0), (1, 1), (1, 1), (0, 0)))
    OH, OW = H // 2, W // 2
    cols = []
    for kh in range(3):
        for kw in range(3):
            cols.append(xp[:, kh:kh + 2 * (OH - 1) + 1:2,
                           kw:kw + 2 * (OW - 1) + 1:2, :])
    patches = jnp.concatenate(cols, axis=-1).reshape(B * OH * OW, 9 * Cin)
    w = p["w"].reshape(9 * Cin, -1)
    out = pallas_matmul(patches, w, p["b"])
    return out.reshape(B, OH, OW, -1)


# ----------------------------------------------------------------------------
# normalisation / elementwise kernels
# ----------------------------------------------------------------------------
_AGGR_CACHE = {}


def _get_aggr(C, groups):
    key = (C, groups)
    if key not in _AGGR_CACHE:
        cg = C // groups
        a = np.repeat(np.eye(groups, dtype=np.float32), cg, axis=0)   # (C, G)
        _AGGR_CACHE[key] = (jnp.asarray(a), jnp.asarray(a.T))
    return _AGGR_CACHE[key]


def _gn_kernel(*refs, eps, silu, inv_n, has_x2):
    if has_x2:
        x1_ref, x2_ref, g_ref, b_ref, a_ref, at_ref, o_ref = refs
        x = jnp.concatenate([x1_ref[0].astype(jnp.float32),
                             x2_ref[0].astype(jnp.float32)], axis=-1)
    else:
        x1_ref, g_ref, b_ref, a_ref, at_ref, o_ref = refs
        x = x1_ref[0].astype(jnp.float32)
    a = a_ref[...]                         # (C, G)
    at = at_ref[...]                       # (G, C)
    s1 = jnp.dot(jnp.sum(x, axis=0, keepdims=True), a,
                 preferred_element_type=jnp.float32)
    s2 = jnp.dot(jnp.sum(x * x, axis=0, keepdims=True), a,
                 preferred_element_type=jnp.float32)
    mean_g = s1 * inv_n
    var_g = jnp.maximum(s2 * inv_n - mean_g * mean_g, 0.0)
    mean_c = jnp.dot(mean_g, at, preferred_element_type=jnp.float32)
    rstd_c = jnp.dot(jax.lax.rsqrt(var_g + eps), at,
                     preferred_element_type=jnp.float32)
    y = (x - mean_c) * rstd_c * g_ref[...] + b_ref[...]
    if silu:
        y = y * jax.nn.sigmoid(y)
    o_ref[0] = y.astype(o_ref.dtype)


def pallas_group_norm(x, gamma, beta, groups=32, eps=1e-5, silu=False, x2=None):
    """GroupNorm (+optional fused SiLU).  Optional second channel chunk `x2` is
    treated as concatenated channels without materialising the concat in HBM."""
    # TODO(synk): two-pass HW-tiled stats for real SR resolutions (per-batch
    # single block is fine at demo sizes; required for v7x's 64 MiB VMEM).
    B = x.shape[0]
    C1 = x.shape[-1]
    C2 = 0 if x2 is None else x2.shape[-1]
    C = C1 + C2
    xf = x.reshape(B, -1, C1).astype(jnp.bfloat16)
    HW = xf.shape[1]
    aggr, aggr_t = _get_aggr(C, groups)

    inputs = [xf]
    in_specs = [pl.BlockSpec((1, HW, C1), lambda b: (b, 0, 0))]
    if x2 is not None:
        inputs.append(x2.reshape(B, HW, C2).astype(jnp.bfloat16))
        in_specs.append(pl.BlockSpec((1, HW, C2), lambda b: (b, 0, 0)))
    inputs += [gamma.astype(jnp.float32).reshape(1, C),
               beta.astype(jnp.float32).reshape(1, C), aggr, aggr_t]
    in_specs += [pl.BlockSpec((1, C), lambda b: (0, 0)),
                 pl.BlockSpec((1, C), lambda b: (0, 0)),
                 pl.BlockSpec((C, groups), lambda b: (0, 0)),
                 pl.BlockSpec((groups, C), lambda b: (0, 0))]

    out = pl.pallas_call(
        functools.partial(_gn_kernel, eps=eps, silu=silu,
                          inv_n=1.0 / float(HW * (C // groups)),
                          has_x2=x2 is not None),
        out_shape=jax.ShapeDtypeStruct((B, HW, C), jnp.bfloat16),
        grid=(B,),
        in_specs=in_specs,
        out_specs=pl.BlockSpec((1, HW, C), lambda b: (b, 0, 0)),
        compiler_params=pltpu.CompilerParams(
            dimension_semantics=("parallel",),
            vmem_limit_bytes=_VMEM_LIMIT),
    )(*inputs)
    return out.reshape(x.shape[:-1] + (C,))


def _ln_kernel(x_ref, g_ref, b_ref, o_ref, *, eps):
    x = x_ref[...].astype(jnp.float32)
    mean = jnp.mean(x, axis=-1, keepdims=True)
    xc = x - mean
    var = jnp.mean(xc * xc, axis=-1, keepdims=True)
    o_ref[...] = (xc * jax.lax.rsqrt(var + eps) * g_ref[...]
                  + b_ref[...]).astype(o_ref.dtype)


def pallas_layer_norm(x, gamma, beta, eps=1e-5):
    shape = x.shape
    C = shape[-1]
    xf = x.reshape(-1, C).astype(jnp.bfloat16)
    M = xf.shape[0]
    tm, Mp = _row_tile(M)
    if Mp != M:
        xf = jnp.pad(xf, ((0, Mp - M), (0, 0)))
    out = pl.pallas_call(
        functools.partial(_ln_kernel, eps=eps),
        out_shape=jax.ShapeDtypeStruct((Mp, C), jnp.bfloat16),
        grid=(Mp // tm,),
        in_specs=[pl.BlockSpec((tm, C), lambda i: (i, 0)),
                  pl.BlockSpec((1, C), lambda i: (0, 0)),
                  pl.BlockSpec((1, C), lambda i: (0, 0))],
        out_specs=pl.BlockSpec((tm, C), lambda i: (i, 0)),
        compiler_params=pltpu.CompilerParams(dimension_semantics=("parallel",)),
    )(xf, gamma.astype(jnp.float32).reshape(1, C),
      beta.astype(jnp.float32).reshape(1, C))
    if Mp != M:
        out = out[:M]
    return out.reshape(shape)


def _silu_kernel(x_ref, o_ref):
    x = x_ref[...].astype(jnp.float32)
    o_ref[...] = (x * jax.nn.sigmoid(x)).astype(o_ref.dtype)


def pallas_silu(x):
    shape = x.shape
    C = shape[-1]
    xf = x.reshape(-1, C).astype(jnp.bfloat16)
    M = xf.shape[0]
    tm, Mp = _row_tile(M)
    if Mp != M:
        xf = jnp.pad(xf, ((0, Mp - M), (0, 0)))
    out = pl.pallas_call(
        _silu_kernel,
        out_shape=jax.ShapeDtypeStruct((Mp, C), jnp.bfloat16),
        grid=(Mp // tm,),
        in_specs=[pl.BlockSpec((tm, C), lambda i: (i, 0))],
        out_specs=pl.BlockSpec((tm, C), lambda i: (i, 0)),
        compiler_params=pltpu.CompilerParams(dimension_semantics=("parallel",)),
    )(xf)
    if Mp != M:
        out = out[:M]
    return out.reshape(shape)


# ----------------------------------------------------------------------------
# attention: all heads per batch in one kernel, bf16 MXU operands, f32 scores
# ----------------------------------------------------------------------------
def _attn_kernel(q_ref, k_ref, v_ref, o_ref, *, nh, dh, scale):
    q = q_ref[0]              # (S, C)  bf16
    k = k_ref[0]              # (Sk, C) bf16
    v = v_ref[0]              # (Sk, C) bf16
    outs = []
    for h in range(nh):
        lo = h * dh
        s = jax.lax.dot_general(q[:, lo:lo + dh], k[:, lo:lo + dh],
                                (((1,), (1,)), ((), ())),
                                preferred_element_type=jnp.float32)
        s = s * scale
        s = s - jnp.max(s, axis=-1, keepdims=True)
        e = jnp.exp(s)
        p = e * pl.reciprocal(jnp.sum(e, axis=-1, keepdims=True), approx=True)
        outs.append(jnp.dot(p.astype(jnp.bfloat16), v[:, lo:lo + dh],
                            preferred_element_type=jnp.float32))
    o_ref[0] = jnp.concatenate(outs, axis=-1).astype(o_ref.dtype)


def pallas_attention(q, k, v, nh, dh, scale):
    """q: (B, S, nh*dh); k, v: (B, Sk, nh*dh) -> (B, S, nh*dh)."""
    # TODO(synk): flash-style Sk tiling with online softmax + head-major weight
    # layout for large spatial S / real SR resolutions.
    B, S, C = q.shape
    Sk = k.shape[1]
    return pl.pallas_call(
        functools.partial(_attn_kernel, nh=nh, dh=dh, scale=scale),
        out_shape=jax.ShapeDtypeStruct((B, S, C), jnp.bfloat16),
        grid=(B,),
        in_specs=[
            pl.BlockSpec((1, S, C), lambda b: (b, 0, 0)),
            pl.BlockSpec((1, Sk, C), lambda b: (b, 0, 0)),
            pl.BlockSpec((1, Sk, C), lambda b: (b, 0, 0)),
        ],
        out_specs=pl.BlockSpec((1, S, C), lambda b: (b, 0, 0)),
        compiler_params=pltpu.CompilerParams(
            dimension_semantics=("parallel",),
            vmem_limit_bytes=_VMEM_LIMIT),
    )(q.astype(jnp.bfloat16), k.astype(jnp.bfloat16), v.astype(jnp.bfloat16))


# ----------------------------------------------------------------------------
# parameter initialisation (deterministic, synthetic; weights stored bf16)
# ----------------------------------------------------------------------------
def init_linear(kg, din, dout, bias=True):
    w = (jax.random.normal(kg(), (din, dout), jnp.float32)
         / np.sqrt(din)).astype(jnp.bfloat16)
    return {"w": w, "b": jnp.zeros((dout,), jnp.float32) if bias else None}


def init_conv3(kg, cin, cout):
    w = (jax.random.normal(kg(), (9, cin, cout), jnp.float32)
         / np.sqrt(9 * cin)).astype(jnp.bfloat16)
    return {"type": "conv", "w": w, "b": jnp.zeros((cout,), jnp.float32)}


def init_gn(c):
    return {"g": jnp.ones((c,), jnp.float32), "b": jnp.zeros((c,), jnp.float32)}


def init_res_block(kg, cin, cout, d_t_emb):
    p = {"type": "res",
         "gn1": init_gn(cin),
         "conv1": init_conv3(kg, cin, cout),
         "emb": init_linear(kg, d_t_emb, cout),
         "gn2": init_gn(cout),
         "conv2": init_conv3(kg, cout, cout)}
    if cin != cout:
        p["skip"] = init_linear(kg, cin, cout)
    return p


def init_cross_attn(kg, d_model, d_cond, n_heads, d_head):
    d_attn = n_heads * d_head

    def _w(din, dout):
        return (jax.random.normal(kg(), (din, dout), jnp.float32)
                / np.sqrt(din)).astype(jnp.bfloat16)

    return {"wq": _w(d_model, d_attn), "wk": _w(d_cond, d_attn),
            "wv": _w(d_cond, d_attn), "out": init_linear(kg, d_attn, d_model),
            "n_heads": n_heads, "d_head": d_head}


def init_tf_block(kg, d_model, n_heads, d_head, d_cond):
    return {
        "ln1": init_gn(d_model),
        "attn1": init_cross_attn(kg, d_model, d_model, n_heads, d_head),
        "ln2": init_gn(d_model),
        "attn2": init_cross_attn(kg, d_model, d_cond, n_heads, d_head),
        "ln3": init_gn(d_model),
        "ffx": init_linear(kg, d_model, d_model * 4),   # GeGLU value half
        "ffg": init_linear(kg, d_model, d_model * 4),   # GeGLU gate half
        "ff_out": init_linear(kg, d_model * 4, d_model),
    }


def init_spatial_tf(kg, channels, n_heads, n_layers, d_cond):
    return {"type": "attn",
            "norm": init_gn(channels),
            "proj_in": init_linear(kg, channels, channels),
            "blocks": [init_tf_block(kg, channels, n_heads,
                                     channels // n_heads, d_cond)
                       for _ in range(n_layers)],
            "proj_out": init_linear(kg, channels, channels)}


def init_down(kg, ch):
    c = init_conv3(kg, ch, ch)
    c["type"] = "down"
    return c


def init_up(kg, ch):
    c = init_conv3(kg, ch, ch)
    c["type"] = "up"
    return c


@dataclasses.dataclass
class UNetConfig:
    in_channels: int = 4
    out_channels: int = 4
    channels: int = 320
    attention_levels: tuple = (0, 1, 2)
    n_res_blocks: int = 2
    channel_multipliers: tuple = (1, 2, 4, 4)
    n_heads: int = 8
    tf_layers: int = 1
    d_cond: int = 768


def init_unet(key, cfg):
    kg = _KeyGen(key)
    ch = cfg.channels
    d_t = ch * 4
    levels = len(cfg.channel_multipliers)
    p = {"time1": init_linear(kg, ch, d_t), "time2": init_linear(kg, d_t, d_t)}

    input_blocks = [[init_conv3(kg, cfg.in_channels, ch)]]
    input_ch = [ch]
    ch_list = [ch * m for m in cfg.channel_multipliers]
    cur = ch
    for i in range(levels):
        for _ in range(cfg.n_res_blocks):
            layers = [init_res_block(kg, cur, ch_list[i], d_t)]
            cur = ch_list[i]
            if i in cfg.attention_levels:
                layers.append(init_spatial_tf(kg, cur, cfg.n_heads,
                                              cfg.tf_layers, cfg.d_cond))
            input_blocks.append(layers)
            input_ch.append(cur)
        if i != levels - 1:
            input_blocks.append([init_down(kg, cur)])
            input_ch.append(cur)
    p["input_blocks"] = input_blocks

    p["middle"] = [init_res_block(kg, cur, cur, d_t),
                   init_spatial_tf(kg, cur, cfg.n_heads, cfg.tf_layers,
                                   cfg.d_cond),
                   init_res_block(kg, cur, cur, d_t)]

    output_blocks = []
    for i in reversed(range(levels)):
        for j in range(cfg.n_res_blocks + 1):
            layers = [init_res_block(kg, cur + input_ch.pop(), ch_list[i], d_t)]
            cur = ch_list[i]
            if i in cfg.attention_levels:
                layers.append(init_spatial_tf(kg, cur, cfg.n_heads,
                                              cfg.tf_layers, cfg.d_cond))
            if i != 0 and j == cfg.n_res_blocks:
                layers.append(init_up(kg, cur))
            output_blocks.append(layers)
    p["output_blocks"] = output_blocks

    p["out_gn"] = init_gn(cur)
    p["out_conv"] = init_conv3(kg, cur, cfg.out_channels)
    return p


# ----------------------------------------------------------------------------
# module forwards (glue orchestrating Pallas kernels)
# ----------------------------------------------------------------------------
def res_block_fwd(p, x, t_silu, skip=None):
    """ResBlock.  `skip` (decoder) is the channel chunk that PyTorch would have
    concatenated onto x; here it stays a separate ref end-to-end."""
    B, H, W, C1 = x.shape
    h = pallas_group_norm(x, p["gn1"]["g"], p["gn1"]["b"], silu=True, x2=skip)
    emb = pallas_matmul(t_silu, p["emb"]["w"], p["emb"]["b"],
                        out_dtype=jnp.float32)                    # (B, Cout)
    h = conv3x3(p["conv1"], h, emb=emb)                           # emb add fused
    h = pallas_group_norm(h, p["gn2"]["g"], p["gn2"]["b"], silu=True)
    Cout = p["conv2"]["w"].shape[-1]

    if "skip" in p:
        h = conv3x3(p["conv2"], h)
        hf = h.reshape(B * H * W, Cout)
        if skip is None:
            out = pallas_matmul(x.reshape(B * H * W, C1), p["skip"]["w"],
                                p["skip"]["b"], residual=hf)      # skip+h fused
        else:
            C2 = skip.shape[-1]
            out = pallas_matmul(x.reshape(B * H * W, C1), p["skip"]["w"][:C1],
                                p["skip"]["b"],
                                a2=skip.reshape(B * H * W, C2),
                                w2=p["skip"]["w"][C1:],
                                residual=hf)                      # dual-K 1x1
        return out.reshape(B, H, W, Cout)
    # identity skip: residual add fused into conv2's epilogue
    return conv3x3(p["conv2"], h, residual=x)


def cross_attention_fwd(p, x, cond, residual):
    B, S, C = x.shape
    nh, dh = p["n_heads"], p["d_head"]
    Sc, Dc = cond.shape[1], cond.shape[2]
    q = pallas_matmul(x.reshape(B * S, C), p["wq"]).reshape(B, S, nh * dh)
    k = pallas_matmul(cond.reshape(B * Sc, Dc), p["wk"]).reshape(B, Sc, nh * dh)
    v = pallas_matmul(cond.reshape(B * Sc, Dc), p["wv"]).reshape(B, Sc, nh * dh)
    o = pallas_attention(q, k, v, nh, dh, scale=dh ** -0.5)
    out = pallas_matmul(o.reshape(B * S, nh * dh), p["out"]["w"], p["out"]["b"],
                        residual=residual.reshape(B * S, C))      # + x fused
    return out.reshape(B, S, C)


def tf_block_fwd(p, x, cond):
    h = pallas_layer_norm(x, p["ln1"]["g"], p["ln1"]["b"])
    x = cross_attention_fwd(p["attn1"], h, h, residual=x)
    h = pallas_layer_norm(x, p["ln2"]["g"], p["ln2"]["b"])
    x = cross_attention_fwd(p["attn2"], h, cond, residual=x)
    h = pallas_layer_norm(x, p["ln3"]["g"], p["ln3"]["b"])
    B, S, C = h.shape
    hf = h.reshape(B * S, C)
    xx = pallas_matmul(hf, p["ffx"]["w"], p["ffx"]["b"])
    g = pallas_matmul(hf, p["ffg"]["w"], p["ffg"]["b"], gate=xx)  # xx*gelu(g) fused
    out = pallas_matmul(g, p["ff_out"]["w"], p["ff_out"]["b"],
                        residual=x.reshape(B * S, C))             # + x fused
    return out.reshape(B, S, C)


def spatial_tf_fwd(p, x, cond):
    B, H, W, C = x.shape
    h = pallas_group_norm(x, p["norm"]["g"], p["norm"]["b"], eps=1e-6)
    hf = pallas_matmul(h.reshape(B * H * W, C), p["proj_in"]["w"],
                       p["proj_in"]["b"])
    hseq = hf.reshape(B, H * W, C)
    for blk in p["blocks"]:
        hseq = tf_block_fwd(blk, hseq, cond)
    out = pallas_matmul(hseq.reshape(B * H * W, C), p["proj_out"]["w"],
                        p["proj_out"]["b"],
                        residual=x.reshape(B * H * W, C))         # + x_in fused
    return out.reshape(B, H, W, C)


def apply_layer(layer, x, t_silu, cond):
    t = layer["type"]
    if t == "conv":
        return conv3x3(layer, x)
    if t == "res":
        return res_block_fwd(layer, x, t_silu)
    if t == "attn":
        return spatial_tf_fwd(layer, x, cond)
    if t == "down":
        return conv_down(layer, x)
    if t == "up":
        # TODO(synk): fold the nearest-2x upsample into the conv's input reads
        # instead of materialising the 4x activation in HBM.
        x = jnp.repeat(jnp.repeat(x, 2, axis=1), 2, axis=2)
        return conv3x3(layer, x)
    raise ValueError(t)


def unet_forward(params, cfg, x_nchw, t, context):
    x = jnp.transpose(x_nchw, (0, 2, 3, 1)).astype(jnp.bfloat16)   # NCHW -> NHWC
    cond = context.astype(jnp.bfloat16)

    # sinusoidal timestep embedding (glue) + time MLP (Pallas matmuls)
    half = cfg.channels // 2
    freqs = jnp.exp(-np.log(10000.0) * jnp.arange(half, dtype=jnp.float32) / half)
    args = t.astype(jnp.float32)[:, None] * freqs[None, :]
    t_emb = jnp.concatenate([jnp.cos(args), jnp.sin(args)], axis=-1)
    t_emb = pallas_matmul(t_emb.astype(jnp.bfloat16), params["time1"]["w"],
                          params["time1"]["b"], act="silu")
    t_emb = pallas_matmul(t_emb, params["time2"]["w"], params["time2"]["b"])
    t_silu = pallas_silu(t_emb)        # SiLU shared by every ResBlock emb layer

    skips = []
    for blk in params["input_blocks"]:
        for layer in blk:
            x = apply_layer(layer, x, t_silu, cond)
        skips.append(x)
    for layer in params["middle"]:
        x = apply_layer(layer, x, t_silu, cond)
    for blk in params["output_blocks"]:
        skip = skips.pop()
        # first layer of every output block is a ResBlock consuming the skip;
        # the channel concat never hits HBM (handled inside the kernels).
        x = res_block_fwd(blk[0], x, t_silu, skip=skip)
        for layer in blk[1:]:
            x = apply_layer(layer, x, t_silu, cond)

    x = pallas_group_norm(x, params["out_gn"]["g"], params["out_gn"]["b"],
                          silu=True)
    x = conv3x3(params["out_conv"], x)
    return jnp.transpose(x.astype(jnp.float32), (0, 3, 1, 2))     # NHWC -> NCHW


# ----------------------------------------------------------------------------
# SuperResolution module (forward == UNet noise prediction)
# ----------------------------------------------------------------------------
class SuperResolution:
    def __init__(self, latent_scaling_factor, n_steps, linear_start, linear_end,
                 input_resolution=(128, 128), unet_config=None, seed=0):
        self.latent_scaling_factor = latent_scaling_factor
        self.n_steps = n_steps
        self.input_resolution = input_resolution
        beta = np.linspace(linear_start ** 0.5, linear_end ** 0.5,
                           n_steps, dtype=np.float64) ** 2
        self.beta = jnp.asarray(beta, dtype=jnp.float32)
        alpha_bar = np.cumprod(1.0 - beta)
        self.alpha_bar = jnp.asarray(alpha_bar, dtype=jnp.float32)
        self.cfg = unet_config if unet_config is not None else UNetConfig()
        self.params = init_unet(jax.random.PRNGKey(seed), self.cfg)
        # TODO(synk): encoder/decoder/Autoencoder/ResidualEncoder are not exercised
        # by SuperResolution.forward (it only calls self.model), so only the
        # UNetModel is built.

    def __call__(self, x, t, context):
        """Predict noise eps(x_t, t, context); x: NCHW latent, context: (B,seq,d_cond)."""
        return unet_forward(self.params, self.cfg, x, t, context)


# ----------------------------------------------------------------------------
# demo
# ----------------------------------------------------------------------------
if __name__ == "__main__":
    key = jax.random.PRNGKey(0)
    kx, kt, kc = jax.random.split(key, 3)

    B, H, W = 2, 16, 16
    # Same architecture as the real SD config, with scaled-down base width so the
    # demo compiles/runs quickly (channels 320 -> 64; everything else identical).
    cfg = UNetConfig(in_channels=4, out_channels=4, channels=64,
                     attention_levels=(0, 1, 2), n_res_blocks=2,
                     channel_multipliers=(1, 2, 4, 4), n_heads=8,
                     tf_layers=1, d_cond=768)

    model = SuperResolution(latent_scaling_factor=0.18215, n_steps=1000,
                            linear_start=0.00085, linear_end=0.0120,
                            unet_config=cfg, seed=0)

    x = jax.random.normal(kx, (B, 4, H, W), jnp.float32)                 # latent, NCHW
    t = jax.random.randint(kt, (B,), 0, 1000).astype(jnp.float32)        # timesteps
    context = jax.random.normal(kc, (B, 8, cfg.d_cond), jnp.float32)     # conditioning

    out = model(x, t, context)
    out = jax.block_until_ready(out)

    assert out.shape == (B, 4, H, W), out.shape
    assert bool(jnp.all(jnp.isfinite(out)))
    print("KERNEL_OK")
</pallas_src>

<mosaic_0001>
module attributes {stable_mosaic.version = 11 : i64} {
  func.func @kernel(%arg0: i32, %arg1: i32, %arg2: i32, %arg3: memref<16x64xbf16, #tpu.memory_space<vmem>>, %arg4: memref<64x256xbf16, #tpu.memory_space<vmem>>, %arg5: memref<1x256xf32, #tpu.memory_space<vmem>>, %arg6: memref<16x256xbf16, #tpu.memory_space<vmem>>, %arg7: memref<16x256xf32, #tpu.memory_space<vmem>>) attributes {dimension_semantics = [#tpu.dimension_semantics<parallel>, #tpu.dimension_semantics<parallel>, #tpu.dimension_semantics<arbitrary>], iteration_bounds = array<i64: 1, 1, 1>, scalar_prefetch = 0 : i64, scratch_operands = 1 : i64, tpu.core_type = #tpu.core_type<tc>, window_params = [{transform_indices = @transform_0, window_bounds = array<i64: 16, 64>}, {transform_indices = @transform_1, window_bounds = array<i64: 64, 256>}, {transform_indices = @transform_2, window_bounds = array<i64: 1, 256>}, {transform_indices = @transform_3, window_bounds = array<i64: 16, 256>}]} {
    %c0_i32 = arith.constant 0 : i32
    %0 = arith.cmpi eq, %arg2, %c0_i32 : i32
    %1 = arith.extui %0 : i1 to i32
    %c0_i32_0 = arith.constant 0 : i32
    %2 = arith.cmpi ne, %1, %c0_i32_0 : i32
    scf.if %2 {
      %cst_10 = arith.constant 0.000000e+00 : f32
      %12 = vector.broadcast %cst_10 : f32 to vector<16x256xf32>
      %c0_11 = arith.constant 0 : index
      %c0_12 = arith.constant 0 : index
      %13 = vector.load %arg7[%c0_11, %c0_12] : memref<16x256xf32, #tpu.memory_space<vmem>>, vector<16x256xf32>
      tpu.vector_store %arg7[%c0_11, %c0_12], %12 {strides = array<i32>} : memref<16x256xf32, #tpu.memory_space<vmem>>, vector<16x256xf32>,
    } else {
    }
    %c0 = arith.constant 0 : index
    %c0_1 = arith.constant 0 : index
    %3 = vector.load %arg7[%c0, %c0_1] : memref<16x256xf32, #tpu.memory_space<vmem>>, vector<16x256xf32>
    %c0_2 = arith.constant 0 : index
    %c0_3 = arith.constant 0 : index
    %4 = vector.load %arg3[%c0_2, %c0_3] : memref<16x64xbf16, #tpu.memory_space<vmem>>, vector<16x64xbf16>
    %c0_4 = arith.constant 0 : index
    %c0_5 = arith.constant 0 : index
    %5 = vector.load %arg4[%c0_4, %c0_5] : memref<64x256xbf16, #tpu.memory_space<vmem>>, vector<64x256xbf16>
    %cst = arith.constant dense<0.000000e+00> : vector<16x256xf32>
    %6 = tpu.matmul %4, %5, %cst {dimension_numbers = #tpu.dot_dimension_numbers<[1], [0], [0], [1], [0, 0, 1, 1], [], []>} : vector<16x64xbf16>, vector<64x256xbf16>, vector<16x256xf32> -> vector<16x256xf32>
    %7 = arith.addf %3, %6 : vector<16x256xf32>
    %c0_6 = arith.constant 0 : index
    %c0_7 = arith.constant 0 : index
    %8 = vector.load %arg7[%c0_6, %c0_7] : memref<16x256xf32, #tpu.memory_space<vmem>>, vector<16x256xf32>
    tpu.vector_store %arg7[%c0_6, %c0_7], %7 {strides = array<i32>} : memref<16x256xf32, #tpu.memory_space<vmem>>, vector<16x256xf32>,
    %c0_i32_8 = arith.constant 0 : i32
    %9 = arith.cmpi eq, %arg2, %c0_i32_8 : i32
    %10 = arith.extui %9 : i1 to i32
    %c0_i32_9 = arith.constant 0 : i32
    %11 = arith.cmpi ne, %10, %c0_i32_9 : i32
    scf.if %11 {
      %c0_10 = arith.constant 0 : index
      %c0_11 = arith.constant 0 : index
      %12 = vector.load %arg7[%c0_10, %c0_11] : memref<16x256xf32, #tpu.memory_space<vmem>>, vector<16x256xf32>
      %c0_12 = arith.constant 0 : index
      %c0_13 = arith.constant 0 : index
      %13 = vector.load %arg5[%c0_12, %c0_13] : memref<1x256xf32, #tpu.memory_space<vmem>>, vector<1x256xf32>
      %14 = vector.broadcast %13 : vector<1x256xf32> to vector<16x256xf32>
      %15 = arith.addf %12, %14 : vector<16x256xf32>
      %16 = arith.negf %15 : vector<16x256xf32>
      %17 = math.exp %16 : vector<16x256xf32>
      %cst_14 = arith.constant 1.000000e+00 : f32
      %18 = vector.broadcast %cst_14 : f32 to vector<16x256xf32>
      %19 = arith.addf %18, %17 : vector<16x256xf32>
      %20 = arith.divf %18, %19 : vector<16x256xf32>
      %21 = arith.mulf %15, %20 : vector<16x256xf32>
      %22 = arith.truncf %21 : vector<16x256xf32> to vector<16x256xbf16>
      %c0_15 = arith.constant 0 : index
      %c0_16 = arith.constant 0 : index
      %23 = vector.load %arg6[%c0_15, %c0_16] : memref<16x256xbf16, #tpu.memory_space<vmem>>, vector<16x256xbf16>
      tpu.vector_store %arg6[%c0_15, %c0_16], %22 {strides = array<i32>} : memref<16x256xbf16, #tpu.memory_space<vmem>>, vector<16x256xbf16>,
    } else {
    }
    return
  }
  func.func @transform_0(%arg0: i32, %arg1: i32, %arg2: i32) -> (i32, i32) {
    %c0_i32 = arith.constant 0 : i32
    return %arg0, %arg2 : i32, i32
  }
  func.func @transform_1(%arg0: i32, %arg1: i32, %arg2: i32) -> (i32, i32) {
    %c0_i32 = arith.constant 0 : i32
    return %arg2, %arg1 : i32, i32
  }
  func.func @transform_2(%arg0: i32, %arg1: i32, %arg2: i32) -> (i32, i32) {
    %c0_i32 = arith.constant 0 : i32
    %c0_i32_0 = arith.constant 0 : i32
    return %c0_i32, %arg1 : i32, i32
  }
  func.func @transform_3(%arg0: i32, %arg1: i32, %arg2: i32) -> (i32, i32) {
    %c0_i32 = arith.constant 0 : i32
    return %arg0, %arg1 : i32, i32
  }
}

</mosaic_0001>

<llo_original>
// kernel: tpu_custom_call.1
$region0: #{tpu_custom_call.1}
  #allocation0 [shape = 'u32[]', space=smem, size = 0x4, offset = 0x4, fixed_abs, tag = 'smem constant byte address 0x4 - core index']
  #allocation1 [shape = 'u32[144,128]{1,0:T(1,128)}', space=vmem, size = 0x12000, scoped, tag = 'internal scratch']
  #allocation2 [shape = 'f32[16,256]{1,0:T(8,128)}', space=vmem, size = 0x4000, scoped, tag = 'scratch operand']
  %s0 = inlined_call_operand.hbm [shape: bf16[16,64], index: 0, kind: input, shape index: {}]
  %s1 = inlined_call_operand.hbm [shape: bf16[64,256], index: 1, kind: input, shape index: {}]
  %s2 = inlined_call_operand.vmem [shape: f32[1,256], index: 2, kind: input, shape index: {}]
  %s3 = inlined_call_operand.hbm [shape: bf16[16,256], index: 3, kind: output, shape index: {}]
  %s4 = sld [smem:[#allocation0]]
  $region38: #{tpu_custom_call.1} parent=0
    _
  %s6 = ssub.s32 1, %s4
  %s7 = scalar_select 0, %s6, %s4
  $region1: #{tpu_custom_call.1} parent=0
    #allocation3 [shape = 'u8[4096]{0}', space=vmem, size = 0x1000, scoped, tag = 'input window, operand 0, single buffered']
    #allocation4 [shape = 's32[1]{0}', space=sflag, size = 0x4, scoped, tag = 'scoped memory for tpu_custom_call.1']
    #allocation5 [shape = 's32[1]{0}', space=sflag, size = 0x4, scoped, tag = 'scoped memory for tpu_custom_call.1']
    #allocation6 [shape = 'u8[32768]{0}', space=vmem, size = 0x8000, scoped, tag = 'input window, operand 1, single buffered']
    #allocation7 [shape = 's32[1]{0}', space=sflag, size = 0x4, scoped, tag = 'scoped memory for tpu_custom_call.1']
    #allocation8 [shape = 'u8[8192]{0}', space=vmem, size = 0x2000, scoped, tag = 'output window, operand 0, single buffered']
    %8 = vsyncpa [#allocation4], 0
    %9 = vsyncpa [#allocation7], 0
    %10 = vsyncpa [#allocation5], 0
    // Predicated region
    $region2: #{tpu_custom_call.1} parent=1 // pred_check
      _
    $region3: #{tpu_custom_call.1} parent=1 // pred_check_branch
      %12 = sbr.rel (0) target = $region5
    $region4: #{tpu_custom_call.1} parent=1 // pred_region
      %s14 = ssub.s32 128, 128
      %15 = vsyncadd [#allocation4], %s14
      %s16 = sshll.u32 [#allocation3], 4
      %s17 = int_to_ptr.vmem [resolvable:$true] %s16
      %22 = dma.hbm_to_vmem [thread:$0]  %s0, 128, %s17, [#allocation4], 64, 64, 4
    $region5: #{tpu_custom_call.1} parent=1 // pred_fallthru
      _
    // Predicated region
    $region6: #{tpu_custom_call.1} parent=1 // pred_check
      _
    $region7: #{tpu_custom_call.1} parent=1 // pred_check_branch
      %24 = sbr.rel (0) target = $region9
    $region8: #{tpu_custom_call.1} parent=1 // pred_region
      %s26 = ssub.s32 1024, 1024
      %27 = vsyncadd [#allocation7], %s26
      %s28 = sshll.u32 [#allocation6], 4
      %s29 = int_to_ptr.vmem [resolvable:$true] %s28
      %34 = dma.hbm_to_vmem [thread:$0]  %s1, 1024, %s29, [#allocation7], 128, 128, 8
    $region9: #{tpu_custom_call.1} parent=1 // pred_fallthru
      _
    // Predicated region
    $region10: #{tpu_custom_call.1} parent=1 // pred_check
      _
    $region11: #{tpu_custom_call.1} parent=1 // pred_check_branch
      %36 = sbr.rel (0) target = $region13
    $region12: #{tpu_custom_call.1} parent=1 // pred_region
      _
    $region13: #{tpu_custom_call.1} parent=1 // pred_fallthru
      _
    // Predicated region
    $region14: #{tpu_custom_call.1} parent=1 // pred_check
      _
    $region15: #{tpu_custom_call.1} parent=1 // pred_check_branch
      %38 = sbr.rel (0) target = $region17
    $region16: #{tpu_custom_call.1} parent=1 // pred_region
      %39 = dma.done [#allocation4], 128
    $region17: #{tpu_custom_call.1} parent=1 // pred_fallthru
      _
    // Predicated region
    $region18: #{tpu_custom_call.1} parent=1 // pred_check
      _
    $region19: #{tpu_custom_call.1} parent=1 // pred_check_branch
      %41 = sbr.rel (0) target = $region21
    $region20: #{tpu_custom_call.1} parent=1 // pred_region
      %42 = dma.done [#allocation7], 1024
    $region21: #{tpu_custom_call.1} parent=1 // pred_fallthru
      _
    %p44 = scmp.eq.s32.totalorder 0, 0
    // Predicated region
    $region22: #{tpu_custom_call.1} parent=1 // pred_check
      %p45 = pneg %p44
    $region23: #{tpu_custom_call.1} parent=1 // pred_check_branch
      %47 = sbr.rel (%p45) target = $region25
    $region24: #{tpu_custom_call.1} parent=1 // pred_region
      %48 = vst [vmem:[#allocation2] sm:$0xff] 0.0
      %49 = vst [vmem:[#allocation2 + $0x8] sm:$0xff] 0.0
      %50 = vst [vmem:[#allocation2 + $0x10] sm:$0xff] 0.0
      %51 = vst [vmem:[#allocation2 + $0x18] sm:$0xff] 0.0
    $region25: #{tpu_custom_call.1} parent=1 // pred_fallthru
      _
    %v52 = vld [vmem:[#allocation2] sm:$0xff]
    %v53 = vld [vmem:[#allocation2 + $0x8] sm:$0xff]
    %v54 = vld [vmem:[#allocation2 + $0x10] sm:$0xff]
    %v55 = vld [vmem:[#allocation2 + $0x18] sm:$0xff]
    %v56 = vld [vmem:[#allocation3] sm:$0xf]
    %v57 = vld [vmem:[#allocation3 + $0x4] sm:$0xf]
    %v58 = vld [vmem:[#allocation6] sm:$0xff]
    %v59 = vld [vmem:[#allocation6 + $0x8] sm:$0xff]
    %v60 = vld [vmem:[#allocation6 + $0x10] sm:$0xff]
    %v61 = vld [vmem:[#allocation6 + $0x18] sm:$0xff]
    %v62 = vld [vmem:[#allocation6 + $0x20] sm:$0xff]
    %v63 = vld [vmem:[#allocation6 + $0x28] sm:$0xff]
    %v64 = vld [vmem:[#allocation6 + $0x30] sm:$0xff]
    %v65 = vld [vmem:[#allocation6 + $0x38] sm:$0xff]
    %v68 = vunpack.c.l.b16 %v56
    %v69 = vunpack.c.l.b16 %v57
    %v70 = vpack.c.b16 %v69, %v68
    %v79 = vunpack.c.l.b16 %v58
    %v80 = vunpack.c.h.b16 %v58
    %v81 = vunpack.c.l.b16 %v59
    %v82 = vunpack.c.h.b16 %v59
    %v83 = vunpack.c.l.b16 %v60
    %v84 = vunpack.c.h.b16 %v60
    %v85 = vunpack.c.l.b16 %v61
    %v86 = vunpack.c.h.b16 %v61
    %v87 = vunpack.c.l.b16 %v62
    %v88 = vunpack.c.h.b16 %v62
    %v89 = vunpack.c.l.b16 %v63
    %v90 = vunpack.c.h.b16 %v63
    %v91 = vunpack.c.l.b16 %v64
    %v92 = vunpack.c.h.b16 %v64
    %v93 = vunpack.c.l.b16 %v65
    %v94 = vunpack.c.h.b16 %v65
    %v95 = vpack.c.b16 %v81, %v79
    %v96 = vpack.c.b16 %v82, %v80
    %v97 = vpack.c.b16 %v85, %v83
    %v98 = vpack.c.b16 %v86, %v84
    %v99 = vpack.c.b16 %v89, %v87
    %v100 = vpack.c.b16 %v90, %v88
    %v101 = vpack.c.b16 %v93, %v91
    %v102 = vpack.c.b16 %v94, %v92
    %vm111 = vcmask 523264
    %v113 = vsel %vm111, %v70, 0
    %115 = vmatprep.subr.bf16.mxu0 0
    %116 = vmatpush1.bf16.msra.mxu0 0
    %117 = vmatprep.subr.bf16.mxu0 0
    %118 = vmatpush1.bf16.msra.mxu0 0
    %119 = vmatprep.subr.bf16.mxu0 0
    %120 = vmatpush1.bf16.msra.mxu0 0
    %121 = vmatprep.subr.bf16.mxu0 0
    %122 = vmatpush1.bf16.msra.mxu0 0
    %123 = vmatprep.subr.bf16.mxu0 %v102
    %124 = vmatpush1.bf16.msra.mxu0 %v101
    %125 = vmatprep.subr.bf16.mxu0 %v100
    %126 = vmatpush1.bf16.msra.mxu0 %v99
    %127 = vmatprep.subr.bf16.mxu0 %v98
    %128 = vmatpush1.bf16.msra.mxu0 %v97
    %129 = vmatprep.subr.bf16.mxu0 %v96
    %130 = vmatpush1.bf16.msra.mxu0 %v95
    %131 = vmatprep.subr.bf16.mxu0 0
    %132 = vmatpush2.bf16.msra.mxu0 0
    %133 = vmatprep.subr.bf16.mxu0 0
    %134 = vmatpush2.bf16.msra.mxu0 0
    %135 = vmatprep.subr.bf16.mxu0 0
    %136 = vmatpush2.bf16.msra.mxu0 0
    %137 = vmatprep.subr.bf16.mxu0 0
    %138 = vmatpush2.bf16.msra.mxu0 0
    %139 = vmatprep.subr.bf16.mxu0 0
    %140 = vmatpush2.bf16.msra.mxu0 0
    %141 = vmatprep.subr.bf16.mxu0 0
    %142 = vmatpush2.bf16.msra.mxu0 0
    %143 = vmatprep.subr.bf16.mxu0 0
    %144 = vmatpush2.bf16.msra.mxu0 0
    %145 = vmatprep.subr.bf16.mxu0 0
    %146 = vmatpush2.bf16.msra.mxu0 0
    %147 = vmatprep.mubr.bf16.mxu0 0
    %148 = vmatmul.mubr.bf16.gmra.mxu0 %v113
    %v149 = vpop.f32.mrf.mxu0
    %v150 = vadd.f32 0.0, %v149
    %v151 = vpop.f32.mrf.mxu0
    %v152 = vadd.f32 0.0, %v151
    %v153 = vpop.f32.mrf.mxu0
    %v154 = vadd.f32 0.0, %v153
    %v155 = vpop.f32.mrf.mxu0
    %v156 = vadd.f32 0.0, %v155
    %157 = vdwg.mxu0
    %v158 = vadd.f32 %v52, %v150
    %v159 = vadd.f32 %v53, %v152
    %v160 = vadd.f32 %v54, %v154
    %v161 = vadd.f32 %v55, %v156
    %162 = vst [vmem:[#allocation2] sm:$0xff] %v158
    %163 = vst [vmem:[#allocation2 + $0x8] sm:$0xff] %v159
    %164 = vst [vmem:[#allocation2 + $0x10] sm:$0xff] %v160
    %165 = vst [vmem:[#allocation2 + $0x18] sm:$0xff] %v161
    // Predicated region
    $region26: #{tpu_custom_call.1} parent=1 // pred_check
      %p166 = pneg %p44
    $region27: #{tpu_custom_call.1} parent=1 // pred_check_branch
      %168 = sbr.rel (%p166) target = $region29
    $region28: #{tpu_custom_call.1} parent=1 // pred_region
      %v169 = vld [vmem:[#allocation2] sm:$0xff]
      %v170 = vld [vmem:[#allocation2 + $0x8] sm:$0xff]
      %v171 = vld [vmem:[#allocation2 + $0x10] sm:$0xff]
      %v172 = vld [vmem:[#allocation2 + $0x18] sm:$0xff]
      %v173 = vld [vmem:[%s2] sm:$0x3]
      %v175 = vlaneseq
      %v176 = vshrl.u32 %v175, 7
      %v177 = vsub.s32 0, %v176
      %v178 = vrot.slane %v173, %v177
      %v179 = vlaneseq
      %v180 = vshrl.u32 %v179, 7
      %v181 = vsub.s32 1, %v180
      %v182 = vrot.slane %v173, %v181
      %v185 = vadd.f32 %v169, %v178
      %v186 = vadd.f32 %v170, %v182
      %v187 = vadd.f32 %v171, %v178
      %v188 = vadd.f32 %v172, %v182
      %v189 = vxor.u32 %v185, 2147483648
      %v190 = vxor.u32 %v186, 2147483648
      %v191 = vxor.u32 %v187, 2147483648
      %v192 = vxor.u32 %v188, 2147483648
      %v193 = vmul.f32 %v189, 1.442695
      %v194 = vpow.pop %v193
      %v195 = vmul.f32 %v190, 1.442695
      %v196 = vpow.pop %v195
      %v197 = vmul.f32 %v191, 1.442695
      %v198 = vpow.pop %v197
      %v199 = vmul.f32 %v192, 1.442695
      %v200 = vpow.pop %v199
      %v201 = vadd.f32 %v194, 1.0
      %v202 = vadd.f32 %v196, 1.0
      %v203 = vadd.f32 %v198, 1.0
      %v204 = vadd.f32 %v200, 1.0
      %v205 = vrcp.pop %v201
      %v206 = vmul.f32 1.0, %v205
      %v207 = vrcp.pop %v202
      %v208 = vmul.f32 1.0, %v207
      %v209 = vrcp.pop %v203
      %v210 = vmul.f32 1.0, %v209
      %v211 = vrcp.pop %v204
      %v212 = vmul.f32 1.0, %v211
      %v213 = vmul.f32 %v185, %v206
      %v214 = vmul.f32 %v186, %v208
      %v215 = vmul.f32 %v187, %v210
      %v216 = vmul.f32 %v188, %v212
      %v217 = vpack.c.bf16 %v215, %v213
      %v218 = vpack.c.bf16 %v216, %v214
      %v221 = vunpack.c.l.b16 %v217
      %v222 = vunpack.c.l.b16 %v218
      %v223 = vunpack.c.h.b16 %v217
      %v224 = vunpack.c.h.b16 %v218
      %v225 = vpack.c.b16 %v222, %v221
      %v226 = vpack.c.b16 %v224, %v223
      %229 = vst [vmem:[#allocation8] sm:$0xff] %v225
      %230 = vst [vmem:[#allocation8 + $0x8] sm:$0xff] %v226
    $region29: #{tpu_custom_call.1} parent=1 // pred_fallthru
      _
    // Predicated region
    $region30: #{tpu_custom_call.1} parent=1 // pred_check
      _
    $region31: #{tpu_custom_call.1} parent=1 // pred_check_branch
      %232 = sbr.rel (0) target = $region33
    $region32: #{tpu_custom_call.1} parent=1 // pred_region
      %s234 = ssub.s32 256, 256
      %235 = vsyncadd [#allocation5], %s234
      %s236 = sshll.u32 [#allocation8], 4
      %s237 = int_to_ptr.vmem [resolvable:$true] %s236
      %242 = dma.vmem_to_hbm [thread:$0]  %s237, 256, %s3, [#allocation5], 128, 128, 8
    $region33: #{tpu_custom_call.1} parent=1 // pred_fallthru
      _
    // Predicated region
    $region34: #{tpu_custom_call.1} parent=1 // pred_check
      _
    $region35: #{tpu_custom_call.1} parent=1 // pred_check_branch
      %244 = sbr.rel (0) target = $region37
    $region36: #{tpu_custom_call.1} parent=1 // pred_region
      %245 = dma.done [#allocation5], 256
    $region37: #{tpu_custom_call.1} parent=1 // pred_fallthru
      _
    %246 = vsyncpa [#allocation4], 1
    %247 = vsyncpa [#allocation7], 1
    %248 = vsyncpa [#allocation5], 1

</llo_original>
